<compile_context>
chip_gen: v7x
topology: tpu7x:2x2x1
jax: 0.10.0
libtpu: 0.0.40
codegen_flags: <defaults>
</compile_context>

<pallas_src>
import jax
import jax.numpy as jnp
from jax.experimental import pallas as pl
from jax.experimental.pallas import tpu as pltpu


def _round_up(x, m):
    return ((x + m - 1) // m) * m


def _vmem_budget_bytes():
    # v5e/v6e: 128 MiB VMEM per TensorCore; v7x: 64 MiB.  Leave ~25% headroom
    # for the compiler.  Fall back to the v7x-safe figure if the query fails.
    try:
        cap = int(pltpu.get_tpu_info().vmem_capacity_bytes)
    except Exception:  # pragma: no cover - conservative fallback
        cap = 64 << 20
    return (cap // 4) * 3


def _sparse_linear_kernel(x_ref, w_ref, m_ref, b_ref, o_ref, acc_ref):
    """One (tb, tn) output tile; K is the last (reduction) grid axis."""
    k = pl.program_id(2)

    @pl.when(k == 0)
    def _():
        acc_ref[...] = jnp.zeros_like(acc_ref)

    # Mask the bf16 weights in-register with the precomputed int8 top-k mask.
    # Weight is in native [N, K] layout, so contract dim 1 of both operands
    # (x[tb, tk] . w[tn, tk]^T) -- no transpose copy anywhere.
    w = jnp.where(m_ref[...] != 0, w_ref[...], jnp.zeros_like(w_ref[...]))
    acc_ref[...] += jax.lax.dot_general(
        x_ref[...], w,
        dimension_numbers=(((1,), (1,)), ((), ())),
        preferred_element_type=jnp.float32,
    )

    @pl.when(k == pl.num_programs(2) - 1)
    def _():
        o_ref[...] = (acc_ref[...] + b_ref[...]).astype(o_ref.dtype)


def sparse_layer_v2_forward(x, connections, weight, bias, max_connections):
    """x: [B, K]; connections: [K, N]; weight: [N, K]; bias: [N] -> [B, N]."""
    B, K = x.shape
    N, K2 = weight.shape
    assert K2 == K and connections.shape == (K, N) and bias.shape == (N,)

    total = K * N
    kk = int(max(0, min(int(max_connections), total)))

    # --- selection: global top-k of flattened connections -> scalar threshold
    # + (row, col) tie-break cutoff (exactly reproduces lax.top_k's
    # lowest-index tie-break, including the all-equal / zero-init case).
    # TODO(synk): torch.topk's global sort has no single-kernel Pallas
    # equivalent; it stays in XLA here and (like the module) re-runs every
    # call -- in training it should be cached while `connections` is unchanged
    # so the Pallas matmul is the real hot path.
    flat = connections.reshape(-1).astype(jnp.float32)
    if kk == 0:
        thr = jnp.float32(jnp.inf)
        cut_row = jnp.int32(-1)
        cut_col = jnp.int32(-1)
    else:
        vals, idxs = jax.lax.top_k(flat, kk)
        thr = vals[-1]
        cut = jnp.max(jnp.where(vals == thr, idxs, -1))
        cut_row = (cut // N).astype(jnp.int32)
        cut_col = (cut % N).astype(jnp.int32)

    # int8 mask produced directly in weight layout [N, K]; the transpose of
    # `connections` fuses into this elementwise pass (no f32 transpose copy).
    conn_t = connections.T.astype(jnp.float32)
    k_idx = jnp.arange(K, dtype=jnp.int32)[None, :]
    n_idx = jnp.arange(N, dtype=jnp.int32)[:, None]
    tie_ok = (k_idx < cut_row) | ((k_idx == cut_row) & (n_idx <= cut_col))
    mask_nk = ((conn_t > thr) | ((conn_t == thr) & tie_ok)).astype(jnp.int8)

    # --- tiling: full-dim (8,128)-aligned blocks when they fit, else 512-wide.
    def _pick(dim, full_cap=2048, tile_pref=512):
        full = _round_up(dim, 128)
        if full <= full_cap:
            return full, full
        return _round_up(dim, tile_pref), tile_pref

    k_pad, tk = _pick(K)
    n_pad, tn = _pick(N)
    if B <= 256:
        b_pad = _round_up(max(B, 1), 8)
        tb = b_pad
    else:
        tb = 256
        b_pad = _round_up(B, tb)

    # v7x has 2 TensorCores: a (1, 1, k) parallel grid leaves half the chip
    # idle, so split N into >= 2 blocks when the problem is a single tile.
    if (b_pad // tb) * (n_pad // tn) == 1 and n_pad >= 256:
        tn = 128 * ((n_pad // 128 + 1) // 2)
        n_pad = max(_round_up(N, tn), 2 * tn)

    out_dtype = x.dtype
    out_bytes = jnp.dtype(out_dtype).itemsize

    def _estimate(tb_, tk_, tn_):
        per_step = (tb_ * tk_ * 2          # x    (bf16)
                    + tn_ * tk_ * 2        # W    (bf16)
                    + tn_ * tk_ * 1        # mask (int8)
                    + tn_ * 4              # bias (f32)
                    + tb_ * tn_ * out_bytes)
        return 2 * per_step + tb_ * tn_ * 4   # double buffers + f32 accumulator

    budget = _vmem_budget_bytes()
    while _estimate(tb, tk, tn) > budget and (tk > 128 or tn > 128):
        if tk >= tn and tk > 128:
            tk = max(128, _round_up(tk // 2, 128))
            k_pad = _round_up(K, tk)
        else:
            tn = max(128, _round_up(tn // 2, 128))
            n_pad = _round_up(N, tn)

    # TODO(synk): in a real layer the bf16 cast / zero-padding of `weight`
    # (and the mask, when connections is frozen) would be done once outside
    # the per-step hot path rather than on every forward call.
    x_p = jnp.pad(x.astype(jnp.bfloat16), ((0, b_pad - B), (0, k_pad - K)))
    w_p = jnp.pad(weight.astype(jnp.bfloat16), ((0, n_pad - N), (0, k_pad - K)))
    m_p = jnp.pad(mask_nk, ((0, n_pad - N), (0, k_pad - K)))
    b_p = jnp.pad(bias.astype(jnp.float32).reshape(1, N), ((0, 0), (0, n_pad - N)))

    grid = (b_pad // tb, n_pad // tn, k_pad // tk)
    vmem_limit = int(min(budget, max(_estimate(tb, tk, tn) + (8 << 20), 32 << 20)))

    out_p = pl.pallas_call(
        _sparse_linear_kernel,
        out_shape=jax.ShapeDtypeStruct((b_pad, n_pad), out_dtype),
        grid_spec=pltpu.PrefetchScalarGridSpec(
            num_scalar_prefetch=0,
            grid=grid,
            in_specs=[
                pl.BlockSpec((tb, tk), lambda b, n, k: (b, k)),   # x     (bf16)
                pl.BlockSpec((tn, tk), lambda b, n, k: (n, k)),   # W[N,K] (bf16)
                pl.BlockSpec((tn, tk), lambda b, n, k: (n, k)),   # mask  (int8)
                pl.BlockSpec((1, tn), lambda b, n, k: (0, n)),    # bias  (f32)
            ],
            out_specs=pl.BlockSpec((tb, tn), lambda b, n, k: (b, n)),
            scratch_shapes=[pltpu.VMEM((tb, tn), jnp.float32)],
        ),
        compiler_params=pltpu.CompilerParams(
            dimension_semantics=("parallel", "parallel", "arbitrary"),
            vmem_limit_bytes=vmem_limit,
        ),
    )(x_p, w_p, m_p, b_p)

    return out_p[:B, :N]


def reference_forward(x, connections, weight, bias, max_connections):
    """f32 reference matching the module: top-k mask scatter + dense matmul."""
    flat = connections.reshape(-1)
    kk = int(max(0, min(int(max_connections), flat.shape[0])))
    if kk == 0:
        mask = jnp.zeros_like(connections)
    else:
        _, top_idx = jax.lax.top_k(flat, kk)
        mask = jnp.zeros_like(flat).at[top_idx].set(1.0).reshape(connections.shape)
    return x @ (mask * weight.T) + bias


def _make_case(key, batch, in_features, out_features, sparsity):
    k_x, k_w, k_c = jax.random.split(key, 3)
    x = jax.random.normal(k_x, (batch, in_features), dtype=jnp.float32)
    limit = jnp.sqrt(6.0 / (in_features + out_features))
    weight = jax.random.uniform(
        k_w, (out_features, in_features), minval=-limit, maxval=limit,
        dtype=jnp.float32)
    bias = jnp.zeros((out_features,), dtype=jnp.float32)
    connections = jax.random.normal(
        k_c, (in_features, out_features), dtype=jnp.float32)
    max_connections = int(in_features * out_features * sparsity)
    return x, connections, weight, bias, max_connections


if __name__ == "__main__":
    key = jax.random.PRNGKey(0)
    k1, k2 = jax.random.split(key)

    # Case 1: small shapes consistent with the module's linear forward.
    x, conn, w, b, mc = _make_case(k1, batch=4, in_features=32,
                                   out_features=64, sparsity=0.5)
    out = jax.block_until_ready(sparse_layer_v2_forward(x, conn, w, b, mc))
    ref = reference_forward(x, conn, w, b, mc)
    assert out.shape == (4, 64)
    # bf16 MXU operands -> loosened tolerance vs. the f32 reference.
    assert jnp.allclose(out, ref, atol=2e-2, rtol=2e-2)

    # Case 2: non-128-multiple K/N (padding path) + multi-block parallel grid.
    x2, conn2, w2, b2, mc2 = _make_case(k2, batch=24, in_features=600,
                                        out_features=520, sparsity=0.5)
    out2 = jax.block_until_ready(sparse_layer_v2_forward(x2, conn2, w2, b2, mc2))
    ref2 = reference_forward(x2, conn2, w2, b2, mc2)
    assert out2.shape == (24, 520)
    assert jnp.allclose(out2, ref2, atol=3e-2, rtol=3e-2)

    # Case 3: all-equal connections (the module's zero init) -> exercises the
    # lowest-index tie-break of the top-k selection exactly.
    x3 = jax.random.normal(jax.random.PRNGKey(3), (2, 16), dtype=jnp.float32)
    conn3 = jnp.zeros((16, 16), dtype=jnp.float32)
    w3 = 0.1 * jax.random.normal(jax.random.PRNGKey(4), (16, 16),
                                 dtype=jnp.float32)
    b3 = jnp.linspace(-1.0, 1.0, 16).astype(jnp.float32)
    mc3 = int(16 * 16 * 0.3)
    out3 = jax.block_until_ready(sparse_layer_v2_forward(x3, conn3, w3, b3, mc3))
    ref3 = reference_forward(x3, conn3, w3, b3, mc3)
    assert out3.shape == (2, 16)
    assert jnp.allclose(out3, ref3, atol=2e-2, rtol=2e-2)

    print("KERNEL_OK")
</pallas_src>

<mosaic_0001>
module attributes {stable_mosaic.version = 11 : i64} {
  func.func @_sparse_linear_kernel(%arg0: i32, %arg1: i32, %arg2: i32, %arg3: memref<8x128xbf16, #tpu.memory_space<vmem>>, %arg4: memref<128x128xbf16, #tpu.memory_space<vmem>>, %arg5: memref<128x128xi8, #tpu.memory_space<vmem>>, %arg6: memref<1x128xf32, #tpu.memory_space<vmem>>, %arg7: memref<8x128xf32, #tpu.memory_space<vmem>>, %arg8: memref<8x128xf32, #tpu.memory_space<vmem>>) attributes {dimension_semantics = [#tpu.dimension_semantics<parallel>, #tpu.dimension_semantics<parallel>, #tpu.dimension_semantics<arbitrary>], iteration_bounds = array<i64: 1, 1, 1>, scalar_prefetch = 0 : i64, scratch_operands = 1 : i64, tpu.core_type = #tpu.core_type<tc>, window_params = [{transform_indices = @transform_0, window_bounds = array<i64: 8, 128>}, {transform_indices = @transform_1, window_bounds = array<i64: 128, 128>}, {transform_indices = @transform_2, window_bounds = array<i64: 128, 128>}, {transform_indices = @transform_3, window_bounds = array<i64: 1, 128>}, {transform_indices = @transform_4, window_bounds = array<i64: 8, 128>}]} {
    %c0_i32 = arith.constant 0 : i32
    %0 = arith.cmpi eq, %arg2, %c0_i32 : i32
    %1 = arith.extui %0 : i1 to i32
    %c0_i32_0 = arith.constant 0 : i32
    %2 = arith.cmpi ne, %1, %c0_i32_0 : i32
    scf.if %2 {
      %cst_13 = arith.constant 0.000000e+00 : f32
      %17 = vector.broadcast %cst_13 : f32 to vector<8x128xf32>
      %c0_14 = arith.constant 0 : index
      %c0_15 = arith.constant 0 : index
      %18 = vector.load %arg8[%c0_14, %c0_15] : memref<8x128xf32, #tpu.memory_space<vmem>>, vector<8x128xf32>
      tpu.vector_store %arg8[%c0_14, %c0_15], %17 {strides = array<i32>} : memref<8x128xf32, #tpu.memory_space<vmem>>, vector<8x128xf32>,
    } else {
    }
    %c0 = arith.constant 0 : index
    %c0_1 = arith.constant 0 : index
    %3 = vector.load %arg5[%c0, %c0_1] : memref<128x128xi8, #tpu.memory_space<vmem>>, vector<128x128xi8>
    %c0_i8 = arith.constant 0 : i8
    %4 = vector.broadcast %c0_i8 : i8 to vector<128x128xi8>
    %5 = arith.cmpi ne, %3, %4 : vector<128x128xi8>
    %c0_2 = arith.constant 0 : index
    %c0_3 = arith.constant 0 : index
    %6 = vector.load %arg4[%c0_2, %c0_3] : memref<128x128xbf16, #tpu.memory_space<vmem>>, vector<128x128xbf16>
    %cst = arith.constant 0.000000e+00 : bf16
    %7 = vector.broadcast %cst : bf16 to vector<128x128xbf16>
    %8 = arith.select %5, %6, %7 : vector<128x128xi1>, vector<128x128xbf16>
    %c0_4 = arith.constant 0 : index
    %c0_5 = arith.constant 0 : index
    %9 = vector.load %arg8[%c0_4, %c0_5] : memref<8x128xf32, #tpu.memory_space<vmem>>, vector<8x128xf32>
    %c0_6 = arith.constant 0 : index
    %c0_7 = arith.constant 0 : index
    %10 = vector.load %arg3[%c0_6, %c0_7] : memref<8x128xbf16, #tpu.memory_space<vmem>>, vector<8x128xbf16>
    %cst_8 = arith.constant dense<0.000000e+00> : vector<8x128xf32>
    %11 = tpu.matmul %10, %8, %cst_8 {dimension_numbers = #tpu.dot_dimension_numbers<[1], [1], [0], [0], [0, 0, 1, 0], [], []>} : vector<8x128xbf16>, vector<128x128xbf16>, vector<8x128xf32> -> vector<8x128xf32>
    %12 = arith.addf %9, %11 : vector<8x128xf32>
    %c0_9 = arith.constant 0 : index
    %c0_10 = arith.constant 0 : index
    %13 = vector.load %arg8[%c0_9, %c0_10] : memref<8x128xf32, #tpu.memory_space<vmem>>, vector<8x128xf32>
    tpu.vector_store %arg8[%c0_9, %c0_10], %12 {strides = array<i32>} : memref<8x128xf32, #tpu.memory_space<vmem>>, vector<8x128xf32>,
    %c0_i32_11 = arith.constant 0 : i32
    %14 = arith.cmpi eq, %arg2, %c0_i32_11 : i32
    %15 = arith.extui %14 : i1 to i32
    %c0_i32_12 = arith.constant 0 : i32
    %16 = arith.cmpi ne, %15, %c0_i32_12 : i32
    scf.if %16 {
      %c0_13 = arith.constant 0 : index
      %c0_14 = arith.constant 0 : index
      %17 = vector.load %arg8[%c0_13, %c0_14] : memref<8x128xf32, #tpu.memory_space<vmem>>, vector<8x128xf32>
      %c0_15 = arith.constant 0 : index
      %c0_16 = arith.constant 0 : index
      %18 = vector.load %arg6[%c0_15, %c0_16] : memref<1x128xf32, #tpu.memory_space<vmem>>, vector<1x128xf32>
      %19 = vector.broadcast %18 : vector<1x128xf32> to vector<8x128xf32>
      %20 = arith.addf %17, %19 : vector<8x128xf32>
      %c0_17 = arith.constant 0 : index
      %c0_18 = arith.constant 0 : index
      %21 = vector.load %arg7[%c0_17, %c0_18] : memref<8x128xf32, #tpu.memory_space<vmem>>, vector<8x128xf32>
      tpu.vector_store %arg7[%c0_17, %c0_18], %20 {strides = array<i32>} : memref<8x128xf32, #tpu.memory_space<vmem>>, vector<8x128xf32>,
    } else {
    }
    return
  }
  func.func @transform_0(%arg0: i32, %arg1: i32, %arg2: i32) -> (i32, i32) {
    %c0_i32 = arith.constant 0 : i32
    return %arg0, %arg2 : i32, i32
  }
  func.func @transform_1(%arg0: i32, %arg1: i32, %arg2: i32) -> (i32, i32) {
    %c0_i32 = arith.constant 0 : i32
    return %arg1, %arg2 : i32, i32
  }
  func.func @transform_2(%arg0: i32, %arg1: i32, %arg2: i32) -> (i32, i32) {
    %c0_i32 = arith.constant 0 : i32
    return %arg1, %arg2 : i32, i32
  }
  func.func @transform_3(%arg0: i32, %arg1: i32, %arg2: i32) -> (i32, i32) {
    %c0_i32 = arith.constant 0 : i32
    %c0_i32_0 = arith.constant 0 : i32
    return %c0_i32, %arg1 : i32, i32
  }
  func.func @transform_4(%arg0: i32, %arg1: i32, %arg2: i32) -> (i32, i32) {
    %c0_i32 = arith.constant 0 : i32
    return %arg0, %arg1 : i32, i32
  }
}

</mosaic_0001>

<llo_original>
// kernel: tpu_custom_call.1
$region0: #{tpu_custom_call.1}
  #allocation0 [shape = 'u32[]', space=smem, size = 0x4, offset = 0x4, fixed_abs, tag = 'smem constant byte address 0x4 - core index']
  #allocation1 [shape = 'u32[144,128]{1,0:T(1,128)}', space=vmem, size = 0x12000, scoped, tag = 'internal scratch']
  #allocation2 [shape = 'f32[8,128]{1,0:T(8,128)}', space=vmem, size = 0x1000, scoped, tag = 'scratch operand']
  %s0 = inlined_call_operand.hbm [shape: bf16[8,128], index: 0, kind: input, shape index: {}]
  %s1 = inlined_call_operand.hbm [shape: bf16[128,128], index: 1, kind: input, shape index: {}]
  %s2 = inlined_call_operand.hbm [shape: s8[128,128], index: 2, kind: input, shape index: {}]
  %s3 = inlined_call_operand.vmem [shape: f32[1,128], index: 3, kind: input, shape index: {}]
  %s4 = inlined_call_operand.hbm [shape: f32[8,128], index: 4, kind: output, shape index: {}]
  %s5 = sld [smem:[#allocation0]]
  $region46: #{tpu_custom_call.1} parent=0
    _
  %s7 = ssub.s32 1, %s5
  %s8 = scalar_select 0, %s7, %s5
  $region1: #{tpu_custom_call.1} parent=0
    #allocation3 [shape = 'u8[2048]{0}', space=vmem, size = 0x800, scoped, tag = 'input window, operand 0, single buffered']
    #allocation4 [shape = 's32[1]{0}', space=sflag, size = 0x4, scoped, tag = 'scoped memory for tpu_custom_call.1']
    #allocation5 [shape = 's32[1]{0}', space=sflag, size = 0x4, scoped, tag = 'scoped memory for tpu_custom_call.1']
    #allocation6 [shape = 'u8[32768]{0}', space=vmem, size = 0x8000, scoped, tag = 'input window, operand 1, single buffered']
    #allocation7 [shape = 's32[1]{0}', space=sflag, size = 0x4, scoped, tag = 'scoped memory for tpu_custom_call.1']
    #allocation8 [shape = 'u8[16384]{0}', space=vmem, size = 0x4000, scoped, tag = 'input window, operand 2, single buffered']
    #allocation9 [shape = 'u8[4096]{0}', space=vmem, size = 0x1000, scoped, tag = 'output window, operand 0, single buffered']
    %9 = vsyncpa [#allocation4], 0
    %10 = vsyncpa [#allocation7], 0
    %11 = vsyncpa [#allocation5], 0
    // Predicated region
    $region2: #{tpu_custom_call.1} parent=1 // pred_check
      _
    $region3: #{tpu_custom_call.1} parent=1 // pred_check_branch
      %13 = sbr.rel (0) target = $region5
    $region4: #{tpu_custom_call.1} parent=1 // pred_region
      %s15 = ssub.s32 64, 64
      %16 = vsyncadd [#allocation4], %s15
      %s18 = sshll.u32 [#allocation3], 4
      %s19 = int_to_ptr.vmem [resolvable:$true] %s18
      %21 = dma.hbm_to_vmem [thread:$0]  %s0, 64, %s19, [#allocation4]
    $region5: #{tpu_custom_call.1} parent=1 // pred_fallthru
      _
    // Predicated region
    $region6: #{tpu_custom_call.1} parent=1 // pred_check
      _
    $region7: #{tpu_custom_call.1} parent=1 // pred_check_branch
      %23 = sbr.rel (0) target = $region9
    $region8: #{tpu_custom_call.1} parent=1 // pred_region
      %s25 = ssub.s32 1024, 1024
      %26 = vsyncadd [#allocation7], %s25
      %s27 = sshll.u32 [#allocation6], 4
      %s28 = int_to_ptr.vmem [resolvable:$true] %s27
      %33 = dma.hbm_to_vmem [thread:$0]  %s1, 1024, %s28, [#allocation7], 64, 64, 4
    $region9: #{tpu_custom_call.1} parent=1 // pred_fallthru
      _
    // Predicated region
    $region10: #{tpu_custom_call.1} parent=1 // pred_check
      _
    $region11: #{tpu_custom_call.1} parent=1 // pred_check_branch
      %35 = sbr.rel (0) target = $region13
    $region12: #{tpu_custom_call.1} parent=1 // pred_region
      %s37 = ssub.s32 512, 512
      %38 = vsyncadd [#allocation7], %s37
      %s39 = sshll.u32 [#allocation8], 4
      %s40 = int_to_ptr.vmem [resolvable:$true] %s39
      %45 = dma.hbm_to_vmem [thread:$0]  %s2, 512, %s40, [#allocation7], 128, 128, 8
    $region13: #{tpu_custom_call.1} parent=1 // pred_fallthru
      _
    // Predicated region
    $region14: #{tpu_custom_call.1} parent=1 // pred_check
      _
    $region15: #{tpu_custom_call.1} parent=1 // pred_check_branch
      %47 = sbr.rel (0) target = $region17
    $region16: #{tpu_custom_call.1} parent=1 // pred_region
      _
    $region17: #{tpu_custom_call.1} parent=1 // pred_fallthru
      _
    // Predicated region
    $region18: #{tpu_custom_call.1} parent=1 // pred_check
      _
    $region19: #{tpu_custom_call.1} parent=1 // pred_check_branch
      %49 = sbr.rel (0) target = $region21
    $region20: #{tpu_custom_call.1} parent=1 // pred_region
      %50 = dma.done [#allocation4], 64
    $region21: #{tpu_custom_call.1} parent=1 // pred_fallthru
      _
    // Predicated region
    $region22: #{tpu_custom_call.1} parent=1 // pred_check
      _
    $region23: #{tpu_custom_call.1} parent=1 // pred_check_branch
      %52 = sbr.rel (0) target = $region25
    $region24: #{tpu_custom_call.1} parent=1 // pred_region
      %53 = dma.done [#allocation7], 1024
    $region25: #{tpu_custom_call.1} parent=1 // pred_fallthru
      _
    // Predicated region
    $region26: #{tpu_custom_call.1} parent=1 // pred_check
      _
    $region27: #{tpu_custom_call.1} parent=1 // pred_check_branch
      %55 = sbr.rel (0) target = $region29
    $region28: #{tpu_custom_call.1} parent=1 // pred_region
      %56 = dma.done [#allocation7], 512
    $region29: #{tpu_custom_call.1} parent=1 // pred_fallthru
      _
    %p61 = scmp.eq.s32.totalorder 0, 0
    // Predicated region
    $region30: #{tpu_custom_call.1} parent=1 // pred_check
      %p62 = pneg %p61
    $region31: #{tpu_custom_call.1} parent=1 // pred_check_branch
      %64 = sbr.rel (%p62) target = $region33
    $region32: #{tpu_custom_call.1} parent=1 // pred_region
      %65 = vst [vmem:[#allocation2] sm:$0xff] 0.0
    $region33: #{tpu_custom_call.1} parent=1 // pred_fallthru
      _
    %v66 = vld [vmem:[#allocation8] sm:$0xff]
    %v67 = vld [vmem:[#allocation8 + $0x8] sm:$0xff]
    %v68 = vld [vmem:[#allocation8 + $0x10] sm:$0xff]
    %v69 = vld [vmem:[#allocation8 + $0x18] sm:$0xff]
    %vm70 = vnez %v66
    %vm71 = vnez %v67
    %vm72 = vnez %v68
    %vm73 = vnez %v69
    %v74 = vld [vmem:[#allocation6] sm:$0xf]
    %v75 = vld [vmem:[#allocation6 + $0x4] sm:$0xf]
    %v76 = vld [vmem:[#allocation6 + $0x8] sm:$0xf]
    %v77 = vld [vmem:[#allocation6 + $0xc] sm:$0xf]
    %v78 = vld [vmem:[#allocation6 + $0x10] sm:$0xf]
    %v79 = vld [vmem:[#allocation6 + $0x14] sm:$0xf]
    %v80 = vld [vmem:[#allocation6 + $0x18] sm:$0xf]
    %v81 = vld [vmem:[#allocation6 + $0x1c] sm:$0xf]
    %v82 = vld [vmem:[#allocation6 + $0x20] sm:$0xf]
    %v83 = vld [vmem:[#allocation6 + $0x24] sm:$0xf]
    %v84 = vld [vmem:[#allocation6 + $0x28] sm:$0xf]
    %v85 = vld [vmem:[#allocation6 + $0x2c] sm:$0xf]
    %v86 = vld [vmem:[#allocation6 + $0x30] sm:$0xf]
    %v87 = vld [vmem:[#allocation6 + $0x34] sm:$0xf]
    %v88 = vld [vmem:[#allocation6 + $0x38] sm:$0xf]
    %v89 = vld [vmem:[#allocation6 + $0x3c] sm:$0xf]
    %v90 = vsel %vm70, 16843009, 0
    %v91 = vsel %vm71, 16843009, 0
    %v92 = vsel %vm72, 16843009, 0
    %v93 = vsel %vm73, 16843009, 0
    %v94 = vunpack.c.0.s8 %v90
    %v95 = vunpack.c.1.s8 %v90
    %v96 = vunpack.c.2.s8 %v90
    %v97 = vunpack.c.3.s8 %v90
    %v98 = vunpack.c.0.s8 %v91
    %v99 = vunpack.c.1.s8 %v91
    %v100 = vunpack.c.2.s8 %v91
    %v101 = vunpack.c.3.s8 %v91
    %v102 = vunpack.c.0.s8 %v92
    %v103 = vunpack.c.1.s8 %v92
    %v104 = vunpack.c.2.s8 %v92
    %v105 = vunpack.c.3.s8 %v92
    %v106 = vunpack.c.0.s8 %v93
    %v107 = vunpack.c.1.s8 %v93
    %v108 = vunpack.c.2.s8 %v93
    %v109 = vunpack.c.3.s8 %v93
    %v110 = vpack.c.b16 %v94, %v94
    %v111 = vpack.c.b8 %v110, %v110
    %v112 = vpack.c.b16 %v95, %v95
    %v113 = vpack.c.b8 %v112, %v112
    %v114 = vpack.c.b16 %v96, %v96
    %v115 = vpack.c.b8 %v114, %v114
    %v116 = vpack.c.b16 %v97, %v97
    %v117 = vpack.c.b8 %v116, %v116
    %v118 = vpack.c.b16 %v98, %v98
    %v119 = vpack.c.b8 %v118, %v118
    %v120 = vpack.c.b16 %v99, %v99
    %v121 = vpack.c.b8 %v120, %v120
    %v122 = vpack.c.b16 %v100, %v100
    %v123 = vpack.c.b8 %v122, %v122
    %v124 = vpack.c.b16 %v101, %v101
    %v125 = vpack.c.b8 %v124, %v124
    %v126 = vpack.c.b16 %v102, %v102
    %v127 = vpack.c.b8 %v126, %v126
    %v128 = vpack.c.b16 %v103, %v103
    %v129 = vpack.c.b8 %v128, %v128
    %v130 = vpack.c.b16 %v104, %v104
    %v131 = vpack.c.b8 %v130, %v130
    %v132 = vpack.c.b16 %v105, %v105
    %v133 = vpack.c.b8 %v132, %v132
    %v134 = vpack.c.b16 %v106, %v106
    %v135 = vpack.c.b8 %v134, %v134
    %v136 = vpack.c.b16 %v107, %v107
    %v137 = vpack.c.b8 %v136, %v136
    %v138 = vpack.c.b16 %v108, %v108
    %v139 = vpack.c.b8 %v138, %v138
    %v140 = vpack.c.b16 %v109, %v109
    %v141 = vpack.c.b8 %v140, %v140
    %vm142 = vnez %v111
    %vm143 = vnez %v113
    %vm144 = vnez %v115
    %vm145 = vnez %v117
    %vm146 = vnez %v119
    %vm147 = vnez %v121
    %vm148 = vnez %v123
    %vm149 = vnez %v125
    %vm150 = vnez %v127
    %vm151 = vnez %v129
    %vm152 = vnez %v131
    %vm153 = vnez %v133
    %vm154 = vnez %v135
    %vm155 = vnez %v137
    %vm156 = vnez %v139
    %vm157 = vnez %v141
    %v158 = vsel %vm142, 16843009, 0
    %v159 = vsel %vm143, 16843009, 0
    %v160 = vsel %vm144, 16843009, 0
    %v161 = vsel %vm145, 16843009, 0
    %v162 = vsel %vm146, 16843009, 0
    %v163 = vsel %vm147, 16843009, 0
    %v164 = vsel %vm148, 16843009, 0
    %v165 = vsel %vm149, 16843009, 0
    %v166 = vsel %vm150, 16843009, 0
    %v167 = vsel %vm151, 16843009, 0
    %v168 = vsel %vm152, 16843009, 0
    %v169 = vsel %vm153, 16843009, 0
    %v170 = vsel %vm154, 16843009, 0
    %v171 = vsel %vm155, 16843009, 0
    %v172 = vsel %vm156, 16843009, 0
    %v173 = vsel %vm157, 16843009, 0
    %v174 = vunpack.c.1.s8 %v158
    %v175 = vunpack.c.0.s8 %v158
    %v176 = vpack.c.b16 %v174, %v175
    %v177 = vunpack.c.1.s8 %v159
    %v178 = vunpack.c.0.s8 %v159
    %v179 = vpack.c.b16 %v177, %v178
    %v180 = vunpack.c.1.s8 %v160
    %v181 = vunpack.c.0.s8 %v160
    %v182 = vpack.c.b16 %v180, %v181
    %v183 = vunpack.c.1.s8 %v161
    %v184 = vunpack.c.0.s8 %v161
    %v185 = vpack.c.b16 %v183, %v184
    %v186 = vunpack.c.1.s8 %v162
    %v187 = vunpack.c.0.s8 %v162
    %v188 = vpack.c.b16 %v186, %v187
    %v189 = vunpack.c.1.s8 %v163
    %v190 = vunpack.c.0.s8 %v163
    %v191 = vpack.c.b16 %v189, %v190
    %v192 = vunpack.c.1.s8 %v164
    %v193 = vunpack.c.0.s8 %v164
    %v194 = vpack.c.b16 %v192, %v193
    %v195 = vunpack.c.1.s8 %v165
    %v196 = vunpack.c.0.s8 %v165
    %v197 = vpack.c.b16 %v195, %v196
    %v198 = vunpack.c.1.s8 %v166
    %v199 = vunpack.c.0.s8 %v166
    %v200 = vpack.c.b16 %v198, %v199
    %v201 = vunpack.c.1.s8 %v167
    %v202 = vunpack.c.0.s8 %v167
    %v203 = vpack.c.b16 %v201, %v202
    %v204 = vunpack.c.1.s8 %v168
    %v205 = vunpack.c.0.s8 %v168
    %v206 = vpack.c.b16 %v204, %v205
    %v207 = vunpack.c.1.s8 %v169
    %v208 = vunpack.c.0.s8 %v169
    %v209 = vpack.c.b16 %v207, %v208
    %v210 = vunpack.c.1.s8 %v170
    %v211 = vunpack.c.0.s8 %v170
    %v212 = vpack.c.b16 %v210, %v211
    %v213 = vunpack.c.1.s8 %v171
    %v214 = vunpack.c.0.s8 %v171
    %v215 = vpack.c.b16 %v213, %v214
    %v216 = vunpack.c.1.s8 %v172
    %v217 = vunpack.c.0.s8 %v172
    %v218 = vpack.c.b16 %v216, %v217
    %v219 = vunpack.c.1.s8 %v173
    %v220 = vunpack.c.0.s8 %v173
    %v221 = vpack.c.b16 %v219, %v220
    %vm222 = vcmp.ne.s16.totalorder %v176, 0
    %vm223 = vcmp.ne.s16.totalorder %v179, 0
    %vm224 = vcmp.ne.s16.totalorder %v182, 0
    %vm225 = vcmp.ne.s16.totalorder %v185, 0
    %vm226 = vcmp.ne.s16.totalorder %v188, 0
    %vm227 = vcmp.ne.s16.totalorder %v191, 0
    %vm228 = vcmp.ne.s16.totalorder %v194, 0
    %vm229 = vcmp.ne.s16.totalorder %v197, 0
    %vm230 = vcmp.ne.s16.totalorder %v200, 0
    %vm231 = vcmp.ne.s16.totalorder %v203, 0
    %vm232 = vcmp.ne.s16.totalorder %v206, 0
    %vm233 = vcmp.ne.s16.totalorder %v209, 0
    %vm234 = vcmp.ne.s16.totalorder %v212, 0
    %vm235 = vcmp.ne.s16.totalorder %v215, 0
    %vm236 = vcmp.ne.s16.totalorder %v218, 0
    %vm237 = vcmp.ne.s16.totalorder %v221, 0
    %v238 = vsel %vm222, %v74, 0
    %v239 = vsel %vm223, %v75, 0
    %v240 = vsel %vm224, %v76, 0
    %v241 = vsel %vm225, %v77, 0
    %v242 = vsel %vm226, %v78, 0
    %v243 = vsel %vm227, %v79, 0
    %v244 = vsel %vm228, %v80, 0
    %v245 = vsel %vm229, %v81, 0
    %v246 = vsel %vm230, %v82, 0
    %v247 = vsel %vm231, %v83, 0
    %v248 = vsel %vm232, %v84, 0
    %v249 = vsel %vm233, %v85, 0
    %v250 = vsel %vm234, %v86, 0
    %v251 = vsel %vm235, %v87, 0
    %v252 = vsel %vm236, %v88, 0
    %v253 = vsel %vm237, %v89, 0
    %v254 = vld [vmem:[#allocation2] sm:$0xff]
    %v255 = vld [vmem:[#allocation3] sm:$0xf]
    %v272 = vunpack.c.l.b16 %v238
    %v273 = vunpack.c.l.b16 %v239
    %v274 = vunpack.c.l.b16 %v240
    %v275 = vunpack.c.l.b16 %v241
    %v276 = vunpack.c.l.b16 %v242
    %v277 = vunpack.c.l.b16 %v243
    %v278 = vunpack.c.l.b16 %v244
    %v279 = vunpack.c.l.b16 %v245
    %v280 = vunpack.c.l.b16 %v246
    %v281 = vunpack.c.l.b16 %v247
    %v282 = vunpack.c.l.b16 %v248
    %v283 = vunpack.c.l.b16 %v249
    %v284 = vunpack.c.l.b16 %v250
    %v285 = vunpack.c.l.b16 %v251
    %v286 = vunpack.c.l.b16 %v252
    %v287 = vunpack.c.l.b16 %v253
    %v288 = vpack.c.b16 %v273, %v272
    %v289 = vpack.c.b16 %v275, %v274
    %v290 = vpack.c.b16 %v277, %v276
    %v291 = vpack.c.b16 %v279, %v278
    %v292 = vpack.c.b16 %v281, %v280
    %v293 = vpack.c.b16 %v283, %v282
    %v294 = vpack.c.b16 %v285, %v284
    %v295 = vpack.c.b16 %v287, %v286
    %304 = vmatprep.subr.bf16.mxu0 0
    %305 = vmatpush1.bf16.xpose.msra.mxu0 %v288
    %306 = vmatprep.subr.bf16.mxu0 0
    %307 = vmatpush1.bf16.xpose.msra.mxu0 %v289
    %308 = vmatprep.subr.bf16.mxu0 0
    %309 = vmatpush1.bf16.xpose.msra.mxu0 %v290
    %310 = vmatprep.subr.bf16.mxu0 0
    %311 = vmatpush1.bf16.xpose.msra.mxu0 %v291
    %312 = vmatprep.subr.bf16.mxu0 0
    %313 = vmatpush1.bf16.xpose.msra.mxu0 %v292
    %314 = vmatprep.subr.bf16.mxu0 0
    %315 = vmatpush1.bf16.xpose.msra.mxu0 %v293
    %316 = vmatprep.subr.bf16.mxu0 0
    %317 = vmatpush1.bf16.xpose.msra.mxu0 %v294
    %318 = vmatprep.subr.bf16.mxu0 0
    %319 = vmatpush1.bf16.xpose.msra.mxu0 %v295
    %320 = vmatprep.subr.bf16.mxu0 0
    %321 = vmatpush1.bf16.xpose.msra.mxu0 0
    %322 = vmatprep.subr.bf16.mxu0 0
    %323 = vmatpush1.bf16.xpose.msra.mxu0 0
    %324 = vmatprep.subr.bf16.mxu0 0
    %325 = vmatpush1.bf16.xpose.msra.mxu0 0
    %326 = vmatprep.subr.bf16.mxu0 0
    %327 = vmatpush1.bf16.xpose.msra.mxu0 0
    %328 = vmatprep.subr.bf16.mxu0 0
    %329 = vmatpush1.bf16.xpose.msra.mxu0 0
    %330 = vmatprep.subr.bf16.mxu0 0
    %331 = vmatpush1.bf16.xpose.msra.mxu0 0
    %332 = vmatprep.subr.bf16.mxu0 0
    %333 = vmatpush1.bf16.xpose.msra.mxu0 0
    %334 = vmatprep.subr.bf16.mxu0 0
    %335 = vmatpush1.bf16.xpose.msra.mxu0 0
    %336 = vmatprep.mubr.bf16.mxu0 0
    %337 = vmatmul.mubr.bf16.gmra.mrb[0].mxu0 %v255
    %v338 = vpop.f32.mrb[0].mxu0
    %v339 = vadd.f32 0.0, %v338
    %v340 = vpop.f32.mrb[0].mxu0
    %v341 = vpop.f32.mrb[0].mxu0
    %v342 = vpop.f32.mrb[0].mxu0
    %343 = vdwg.mxu0
    %v344 = vadd.f32 %v254, %v339
    %345 = vst [vmem:[#allocation2] sm:$0xff] %v344
    // Predicated region
    $region34: #{tpu_custom_call.1} parent=1 // pred_check
      %p346 = pneg %p61
    $region35: #{tpu_custom_call.1} parent=1 // pred_check_branch
      %348 = sbr.rel (%p346) target = $region37
    $region36: #{tpu_custom_call.1} parent=1 // pred_region
      %v349 = vld [vmem:[#allocation2] sm:$0xff]
      %v350 = vld [vmem:[%s3] sm:$0x1]
      %v352 = vlaneseq
      %v353 = vshrl.u32 %v352, 7
      %v354 = vsub.s32 0, %v353
      %v355 = vrot.slane %v350, %v354
      %v357 = vadd.f32 %v349, %v355
      %358 = vst [vmem:[#allocation9] sm:$0xff] %v357
    $region37: #{tpu_custom_call.1} parent=1 // pred_fallthru
      _
    // Predicated region
    $region38: #{tpu_custom_call.1} parent=1 // pred_check
      _
    $region39: #{tpu_custom_call.1} parent=1 // pred_check_branch
      %360 = sbr.rel (0) target = $region41
    $region40: #{tpu_custom_call.1} parent=1 // pred_region
      %s362 = ssub.s32 128, 128
      %363 = vsyncadd [#allocation5], %s362
      %s365 = sshll.u32 [#allocation9], 4
      %s366 = int_to_ptr.vmem [resolvable:$true] %s365
      %368 = dma.vmem_to_hbm [thread:$0]  %s366, 128, %s4, [#allocation5]
    $region41: #{tpu_custom_call.1} parent=1 // pred_fallthru
      _
    // Predicated region
    $region42: #{tpu_custom_call.1} parent=1 // pred_check
      _
    $region43: #{tpu_custom_call.1} parent=1 // pred_check_branch
      %370 = sbr.rel (0) target = $region45
    $region44: #{tpu_custom_call.1} parent=1 // pred_region
      %371 = dma.done [#allocation5], 128
    $region45: #{tpu_custom_call.1} parent=1 // pred_fallthru
      _
    %372 = vsyncpa [#allocation4], 1
    %373 = vsyncpa [#allocation7], 1
    %374 = vsyncpa [#allocation5], 1

</llo_original>
